<compile_context>
chip_gen: v6e
topology: v6e:2x2x1
jax: 0.10.0
libtpu: 0.0.40
codegen_flags: <defaults>
</compile_context>

<pallas_src>
import functools

import jax
import jax.numpy as jnp
from jax import lax
from jax.experimental import pallas as pl
from jax.experimental.pallas import tpu as pltpu


# ----------------------------------------------------------------------------
# Small helpers / hardware heuristics
# ----------------------------------------------------------------------------
def _round_up(n, m):
    return ((n + m - 1) // m) * m


def _device_kind():
    try:
        return jax.devices()[0].device_kind.lower()
    except Exception:
        return ""


def _num_tensorcores():
    """Only split the serial recurrence across cores on multi-TC chips."""
    kind = _device_kind()
    if not kind or "lite" in kind:          # v5e / v6e are single-TC
        return 1
    for tag in ("v7", "v5p", "v4"):
        if tag in kind:
            return 2
    return 1


def _vmem_limit_bytes():
    kind = _device_kind()
    if "v7" in kind:                        # 64 MiB physical VMEM
        return 48 * 1024 * 1024
    if any(t in kind for t in ("v5", "v6", "v4")):
        return 64 * 1024 * 1024             # 128 MiB physical
    return 32 * 1024 * 1024


# Capability probe: single-buffering of grid-constant blocks via
# pipeline_mode=pl.Buffered(1).  Falls back to default (double) buffering if
# the installed jax/Mosaic rejects it, so the kernel always runs.
_SINGLE_BUF = None


def _probe_copy_kernel(x_ref, o_ref):
    o_ref[...] = x_ref[...]


def _single_buffer_supported():
    global _SINGLE_BUF
    if _SINGLE_BUF is None:
        try:
            spec = pl.BlockSpec((8, 128), lambda i: (0, 0),
                                pipeline_mode=pl.Buffered(1))
            fn = pl.pallas_call(
                _probe_copy_kernel,
                out_shape=jax.ShapeDtypeStruct((8, 128), jnp.float32),
                grid=(1,),
                in_specs=[spec],
                out_specs=pl.BlockSpec((8, 128), lambda i: (0, 0)),
            )
            jax.block_until_ready(fn(jnp.zeros((8, 128), jnp.float32)))
            _SINGLE_BUF = True
        except Exception:
            _SINGLE_BUF = False
    return _SINGLE_BUF


def _const_spec(shape, index_map):
    """BlockSpec for a block whose index never changes -> single buffer."""
    if _single_buffer_supported():
        return pl.BlockSpec(shape, index_map, pipeline_mode=pl.Buffered(1))
    return pl.BlockSpec(shape, index_map)


def _plan_chunks(T, Bp, Gp, Hp, Nout, *, vmem_budget):
    """Pick a time-chunk size (<=256) fitting VMEM with minimal time padding."""
    per_t = Bp * (Gp + Nout) * 4 * 2 + Bp * Hp * 4      # db f32 gates + hseq scratch
    fixed = (Hp * Gp + Hp * Nout) * 2 + 4 * Bp * Hp * 4  # bf16 weights + states
    tt_max = (vmem_budget - fixed) // max(per_t, 1)
    tt_max = max(8, min(256, int(tt_max)))
    nt = max(1, -(-T // tt_max))
    tt = -(-T // nt)                                     # minimal padding
    return tt, nt * tt


# ----------------------------------------------------------------------------
# Kernels
# ----------------------------------------------------------------------------
def _time_matmul_kernel(x_ref, w_ref, b_ref, out_ref):
    # x_ref: (tt, B, K) f32 ; w_ref: (K, N) bf16 ; b_ref: (1, N) f32
    tt, B, K = x_ref.shape
    N = w_ref.shape[1]
    x = x_ref[...].reshape(tt * B, K).astype(jnp.bfloat16)
    y = jnp.dot(x, w_ref[...], preferred_element_type=jnp.float32) + b_ref[...]
    out_ref[...] = y.reshape(tt, B, N)


def _lstm_chunk_kernel(*refs, hp, tt, t_valid, t_padded, unroll,
                       bias_only, fuse_next):
    """One LSTM layer recurrence over a time chunk.

    bias_only : x-gates are a constant (1,4H) bias (decoder layer-0).
    fuse_next : after the serial loop, matmul the chunk's hidden sequence
                (kept in VMEM scratch) with the next layer's input-gate
                weight (or the final fc weight) and emit that directly.
    Gate column order is (i, f, o, g): one contiguous sigmoid + one tanh.
    """
    it = iter(refs)
    if bias_only:
        bias_ref = next(it)
    else:
        xg_ref = next(it)
    hinit_ref = next(it)
    whh_ref = next(it)
    if fuse_next:
        wnext_ref = next(it)
        bnext_ref = next(it)
        out_ref = next(it)
    hfin_ref = next(it)
    h_sc = next(it)
    c_sc = next(it)
    if fuse_next:
        hseq_sc = next(it)

    H = hp

    @pl.when(pl.program_id(1) == 0)
    def _():
        h_sc[...] = hinit_ref[...]
        c_sc[...] = jnp.zeros_like(c_sc)

    if bias_only:
        xbias = bias_ref[...]
    need_mask = t_valid < t_padded
    t0 = pl.program_id(1) * tt

    def body(i, carry):
        h, c = carry
        # recurrent gate contribution: bf16 operands, f32 accumulation
        g = jnp.dot(h.astype(jnp.bfloat16), whh_ref[...],
                    preferred_element_type=jnp.float32)
        g = g + (xbias if bias_only else xg_ref[i])
        s = jax.nn.sigmoid(g[:, :3 * H])
        gg = jnp.tanh(g[:, 3 * H:])
        c_new = s[:, H:2 * H] * c + s[:, :H] * gg
        h_new = s[:, 2 * H:3 * H] * jnp.tanh(c_new)
        if need_mask:
            # freeze the state past the last valid step so the final hidden
            # read from scratch equals h[T-1] despite time padding
            keep = ((t0 + i) < t_valid).astype(jnp.float32)
            h_new = keep * h_new + (1.0 - keep) * h
            c_new = keep * c_new + (1.0 - keep) * c
        if fuse_next:
            hseq_sc[i] = h_new
        return (h_new, c_new)

    h, c = lax.fori_loop(0, tt, body, (h_sc[...], c_sc[...]), unroll=unroll)
    h_sc[...] = h
    c_sc[...] = c
    hfin_ref[...] = h

    if fuse_next:
        bb = h_sc.shape[0]
        N = out_ref.shape[-1]
        hs = hseq_sc[...].reshape(tt * bb, H).astype(jnp.bfloat16)
        y = jnp.dot(hs, wnext_ref[...], preferred_element_type=jnp.float32)
        out_ref[...] = (y + bnext_ref[...]).reshape(tt, bb, N)


# ----------------------------------------------------------------------------
# pallas_call wrappers
# ----------------------------------------------------------------------------
def time_matmul(x, w, b, *, tt):
    """(Tp, Bp, K) @ (K, N) + (1, N) -> (Tp, Bp, N), time-chunked & pipelined."""
    Tp, Bp, K = x.shape
    N = w.shape[1]
    return pl.pallas_call(
        _time_matmul_kernel,
        out_shape=jax.ShapeDtypeStruct((Tp, Bp, N), jnp.float32),
        grid_spec=pltpu.PrefetchScalarGridSpec(
            num_scalar_prefetch=0,
            grid=(Tp // tt,),
            in_specs=[
                pl.BlockSpec((tt, Bp, K), lambda t: (t, 0, 0)),
                _const_spec((K, N), lambda t: (0, 0)),
                _const_spec((1, N), lambda t: (0, 0)),
            ],
            out_specs=pl.BlockSpec((tt, Bp, N), lambda t: (t, 0, 0)),
        ),
        compiler_params=pltpu.CompilerParams(
            dimension_semantics=("parallel",),
            vmem_limit_bytes=_vmem_limit_bytes()),
    )(x, w, b)


def lstm_chunk_pass(*, x_gates=None, gate_bias=None, h_init, w_hh,
                    w_next=None, b_next=None, t_padded, t_valid, tt, unroll):
    """One LSTM layer over the whole (chunked) sequence.

    Returns (next_layer_gates, h_final) when w_next is given, else h_final.
    """
    bias_only = x_gates is None
    fuse_next = w_next is not None
    Bp, Hp = h_init.shape
    Gp = w_hh.shape[1]
    nb = 2 if (_num_tensorcores() >= 2 and Bp >= 16 and Bp % 16 == 0) else 1
    bb = Bp // nb
    nt = t_padded // tt
    N = w_next.shape[1] if fuse_next else 0

    kernel = functools.partial(
        _lstm_chunk_kernel, hp=Hp, tt=tt, t_valid=t_valid, t_padded=t_padded,
        unroll=unroll, bias_only=bias_only, fuse_next=fuse_next)

    in_specs, inputs = [], []
    if bias_only:
        in_specs.append(_const_spec((1, Gp), lambda b, t: (0, 0)))
        inputs.append(gate_bias)
    else:
        in_specs.append(pl.BlockSpec((tt, bb, Gp), lambda b, t: (t, b, 0)))
        inputs.append(x_gates)
    in_specs.append(pl.BlockSpec((bb, Hp), lambda b, t: (b, 0)))
    inputs.append(h_init)
    in_specs.append(_const_spec((Hp, Gp), lambda b, t: (0, 0)))
    inputs.append(w_hh)
    if fuse_next:
        in_specs.append(_const_spec((Hp, N), lambda b, t: (0, 0)))
        inputs.append(w_next)
        in_specs.append(_const_spec((1, N), lambda b, t: (0, 0)))
        inputs.append(b_next)

    hfin_shape = jax.ShapeDtypeStruct((Bp, Hp), jnp.float32)
    hfin_spec = pl.BlockSpec((bb, Hp), lambda b, t: (b, 0))
    if fuse_next:
        out_shape = (jax.ShapeDtypeStruct((t_padded, Bp, N), jnp.float32),
                     hfin_shape)
        out_specs = (pl.BlockSpec((tt, bb, N), lambda b, t: (t, b, 0)),
                     hfin_spec)
    else:
        out_shape = hfin_shape
        out_specs = hfin_spec

    scratch = [pltpu.VMEM((bb, Hp), jnp.float32),
               pltpu.VMEM((bb, Hp), jnp.float32)]
    if fuse_next:
        scratch.append(pltpu.VMEM((tt, bb, Hp), jnp.float32))

    return pl.pallas_call(
        kernel,
        out_shape=out_shape,
        grid_spec=pltpu.PrefetchScalarGridSpec(
            num_scalar_prefetch=0,
            grid=(nb, nt),
            in_specs=in_specs,
            out_specs=out_specs,
            scratch_shapes=scratch,
        ),
        compiler_params=pltpu.CompilerParams(
            dimension_semantics=("parallel", "arbitrary"),
            vmem_limit_bytes=_vmem_limit_bytes()),
    )(*inputs)


# ----------------------------------------------------------------------------
# Weight prep: fold input_proj into encoder layer-0 gates, permute gate
# columns (i,f,g,o)->(i,f,o,g), zero-pad H/O to 128 lanes, cast weights bf16.
# Zero padding is exact (padded pre-activations are 0 -> padded c/h stay 0).
# ----------------------------------------------------------------------------
def pack_params(params, *, lane=128):
    H = params["w_proj"].shape[1]
    O = params["w_fc"].shape[1]
    Hp = _round_up(H, lane)
    Op = _round_up(O, lane)
    bf16, f32 = jnp.bfloat16, jnp.float32

    def gate_w(w):                      # (K, 4H) -> (K, 4Hp), reorder to i,f,o,g
        i, f, g, o = jnp.split(w, 4, axis=1)
        pad = lambda a: jnp.pad(a, ((0, 0), (0, Hp - H)))
        return jnp.concatenate([pad(i), pad(f), pad(o), pad(g)], axis=1)

    def gate_b(b):                      # (4H,) -> (1, 4Hp)
        i, f, g, o = jnp.split(b, 4)
        pad = lambda a: jnp.pad(a, (0, Hp - H))
        return jnp.concatenate([pad(i), pad(f), pad(o), pad(g)])[None, :].astype(f32)

    def pad_rows(w):                    # (H, N) -> (Hp, N)
        return jnp.pad(w, ((0, Hp - H), (0, 0)))

    # Fold input projection into encoder layer-0 input-gate weights (f32 fold,
    # then bf16 storage).
    w_comb = params["w_proj"] @ params["enc_w_ih0"]                    # (Din, 4H)
    b_comb = (params["b_proj"] @ params["enc_w_ih0"]
              + params["enc_b_ih0"] + params["enc_b_hh0"])             # (4H,)

    return dict(
        H=H, Hp=Hp, O=O, Op=Op,
        w_comb=gate_w(w_comb).astype(bf16),
        b_comb=gate_b(b_comb),
        enc_whh0=pad_rows(gate_w(params["enc_w_hh0"])).astype(bf16),
        enc_wih1=pad_rows(gate_w(params["enc_w_ih1"])).astype(bf16),
        enc_b1=gate_b(params["enc_b_ih1"] + params["enc_b_hh1"]),
        enc_whh1=pad_rows(gate_w(params["enc_w_hh1"])).astype(bf16),
        # decoder input is all zeros -> layer-0 x-gates are just the biases
        dec_b0=gate_b(params["dec_b_ih0"] + params["dec_b_hh0"]),
        dec_whh0=pad_rows(gate_w(params["dec_w_hh0"])).astype(bf16),
        dec_wih1=pad_rows(gate_w(params["dec_w_ih1"])).astype(bf16),
        dec_b1=gate_b(params["dec_b_ih1"] + params["dec_b_hh1"]),
        dec_whh1=pad_rows(gate_w(params["dec_w_hh1"])).astype(bf16),
        w_fc=jnp.pad(params["w_fc"], ((0, Hp - H), (0, Op - O))).astype(bf16),
        b_fc=jnp.pad(params["b_fc"], (0, Op - O))[None, :].astype(f32),
    )


# ----------------------------------------------------------------------------
# Forward
# ----------------------------------------------------------------------------
def temporal_rnn_compressor_forward(x, pp, *, output_time_steps):
    """x: (B, T, input_size) -> (B, output_time_steps, output_size)."""
    B, T, _ = x.shape
    Hp, Op, O = pp["Hp"], pp["Op"], pp["O"]
    Gp = 4 * Hp
    Bp = _round_up(B, 8)
    budget = int(_vmem_limit_bytes() * 0.6)

    # ---- encoder ---------------------------------------------------------
    tt_e, Tp = _plan_chunks(T, Bp, Gp, Hp, Gp, vmem_budget=budget)
    unroll_e = max(1, min(8, tt_e))

    x_tm = jnp.transpose(x, (1, 0, 2)).astype(jnp.float32)     # (T, B, Din)
    x_tm = jnp.pad(x_tm, ((0, Tp - T), (0, Bp - B), (0, 0)))   # (Tp, Bp, Din)

    # layer-0 x-gates = x @ (w_proj @ W_ih0) + folded biases (one big matmul)
    xg0 = time_matmul(x_tm, pp["w_comb"], pp["b_comb"], tt=tt_e)   # (Tp,Bp,Gp)
    zeros_h = jnp.zeros((Bp, Hp), jnp.float32)

    # encoder layer 0: recurrence, fused with the layer-1 input-gate matmul
    xg1, h0_fin = lstm_chunk_pass(
        x_gates=xg0, h_init=zeros_h, w_hh=pp["enc_whh0"],
        w_next=pp["enc_wih1"], b_next=pp["enc_b1"],
        t_padded=Tp, t_valid=T, tt=tt_e, unroll=unroll_e)

    # encoder layer 1: only the final hidden state is needed downstream
    h1_fin = lstm_chunk_pass(
        x_gates=xg1, h_init=zeros_h, w_hh=pp["enc_whh1"],
        t_padded=Tp, t_valid=T, tt=tt_e, unroll=unroll_e)

    # ---- decoder (zero inputs, h0 = encoder finals, c0 = 0) ---------------
    To = output_time_steps
    tt_d, Top = _plan_chunks(To, Bp, Gp, Hp, Gp, vmem_budget=budget)
    unroll_d = max(1, min(8, tt_d))

    # decoder layer 0: bias-only gates, fused with layer-1 input-gate matmul
    dg1, _ = lstm_chunk_pass(
        gate_bias=pp["dec_b0"], h_init=h0_fin, w_hh=pp["dec_whh0"],
        w_next=pp["dec_wih1"], b_next=pp["dec_b1"],
        t_padded=Top, t_valid=To, tt=tt_d, unroll=unroll_d)

    # decoder layer 1: recurrence fused with the final fc matmul
    out_tm, _ = lstm_chunk_pass(
        x_gates=dg1, h_init=h1_fin, w_hh=pp["dec_whh1"],
        w_next=pp["w_fc"], b_next=pp["b_fc"],
        t_padded=Top, t_valid=To, tt=tt_d, unroll=unroll_d)

    return jnp.transpose(out_tm[:To, :B, :O], (1, 0, 2))           # (B, To, O)


# ----------------------------------------------------------------------------
# Deterministic parameter init (shapes per nn.Module.__init__; weights stored
# pre-transposed as (in_features, out_features) for y = x @ W + b; gate order
# i,f,g,o like PyTorch)
# ----------------------------------------------------------------------------
def init_params(key, input_size, hidden_size, output_size):
    H, G = hidden_size, 4 * hidden_size
    ks = jax.random.split(key, 20)
    s = 1.0 / jnp.sqrt(jnp.float32(hidden_size))

    def u(k, shape):
        return jax.random.uniform(k, shape, jnp.float32, -s, s)

    return dict(
        w_proj=u(ks[0], (input_size, H)), b_proj=u(ks[1], (H,)),
        enc_w_ih0=u(ks[2], (H, G)), enc_w_hh0=u(ks[3], (H, G)),
        enc_b_ih0=u(ks[4], (G,)), enc_b_hh0=u(ks[5], (G,)),
        enc_w_ih1=u(ks[6], (H, G)), enc_w_hh1=u(ks[7], (H, G)),
        enc_b_ih1=u(ks[8], (G,)), enc_b_hh1=u(ks[9], (G,)),
        dec_w_ih0=u(ks[10], (H, G)), dec_w_hh0=u(ks[11], (H, G)),
        dec_b_ih0=u(ks[12], (G,)), dec_b_hh0=u(ks[13], (G,)),
        dec_w_ih1=u(ks[14], (H, G)), dec_w_hh1=u(ks[15], (H, G)),
        dec_b_ih1=u(ks[16], (G,)), dec_b_hh1=u(ks[17], (G,)),
        w_fc=u(ks[18], (H, output_size)), b_fc=u(ks[19], (output_size,)),
    )


# ----------------------------------------------------------------------------
# Pure-JAX f32 reference (mirrors PyTorch LSTM semantics) for a self-check
# ----------------------------------------------------------------------------
def _ref_lstm_layer(xs, h0, c0, w_ih, w_hh, b_ih, b_hh):
    def step(carry, x):
        h, c = carry
        g = x @ w_ih + b_ih + h @ w_hh + b_hh
        i, f, gg, o = jnp.split(g, 4, axis=-1)
        c = jax.nn.sigmoid(f) * c + jax.nn.sigmoid(i) * jnp.tanh(gg)
        h = jax.nn.sigmoid(o) * jnp.tanh(c)
        return (h, c), h
    (hT, _), hs = lax.scan(step, (h0, c0), xs)
    return hs, hT


def reference_forward(x, params, *, output_time_steps):
    B, T, Din = x.shape
    H = params["w_proj"].shape[1]
    proj = x @ params["w_proj"] + params["b_proj"]      # (B, T, H)
    xs = jnp.transpose(proj, (1, 0, 2))                 # (T, B, H)
    z = jnp.zeros((B, H), jnp.float32)
    hs0, hT0 = _ref_lstm_layer(xs, z, z, params["enc_w_ih0"],
                               params["enc_w_hh0"], params["enc_b_ih0"],
                               params["enc_b_hh0"])
    _, hT1 = _ref_lstm_layer(hs0, z, z, params["enc_w_ih1"],
                             params["enc_w_hh1"], params["enc_b_ih1"],
                             params["enc_b_hh1"])
    dec_in = jnp.zeros((output_time_steps, B, H), jnp.float32)
    ds0, _ = _ref_lstm_layer(dec_in, hT0, z, params["dec_w_ih0"],
                             params["dec_w_hh0"], params["dec_b_ih0"],
                             params["dec_b_hh0"])
    ds1, _ = _ref_lstm_layer(ds0, hT1, z, params["dec_w_ih1"],
                             params["dec_w_hh1"], params["dec_b_ih1"],
                             params["dec_b_hh1"])
    out = ds1 @ params["w_fc"] + params["b_fc"]         # (T_out, B, O)
    return jnp.transpose(out, (1, 0, 2))


if __name__ == "__main__":
    B, T, Din, H, O, T_out = 2, 8, 16, 32, 8, 5
    key = jax.random.PRNGKey(0)
    kx, kp = jax.random.split(key)
    x = jax.random.normal(kx, (B, T, Din), jnp.float32)
    params = init_params(kp, Din, H, O)
    packed = pack_params(params)

    out = temporal_rnn_compressor_forward(x, packed, output_time_steps=T_out)
    out = jax.block_until_ready(out)

    ref = reference_forward(x, params, output_time_steps=T_out)
    assert out.shape == (B, T_out, O), out.shape
    err = float(jnp.max(jnp.abs(out - ref)))
    # bf16 MXU operands (f32 accumulation) -> loosened tolerance vs f32 ref
    assert err < 5e-2, err
    print("KERNEL_OK")
</pallas_src>

<mosaic_0001>
module attributes {stable_mosaic.version = 11 : i64} {
  func.func @_probe_copy_kernel(%arg0: i32, %arg1: memref<8x128xf32, #tpu.memory_space<vmem>>, %arg2: memref<8x128xf32, #tpu.memory_space<vmem>>) attributes {dimension_semantics = [#tpu.dimension_semantics<arbitrary>], iteration_bounds = array<i64: 1>, scalar_prefetch = 0 : i64, scratch_operands = 0 : i64, tpu.core_type = #tpu.core_type<tc>, window_params = [{pipeline_mode = #tpu.pipeline_mode<synchronous>, transform_indices = @transform_0, window_bounds = array<i64: 8, 128>}, {pipeline_mode = #tpu.pipeline_mode<synchronous>, transform_indices = @transform_1, window_bounds = array<i64: 8, 128>}]} {
    %c0 = arith.constant 0 : index
    %c0_0 = arith.constant 0 : index
    %0 = vector.load %arg1[%c0, %c0_0] : memref<8x128xf32, #tpu.memory_space<vmem>>, vector<8x128xf32>
    %c0_1 = arith.constant 0 : index
    %c0_2 = arith.constant 0 : index
    %1 = vector.load %arg2[%c0_1, %c0_2] : memref<8x128xf32, #tpu.memory_space<vmem>>, vector<8x128xf32>
    tpu.vector_store %arg2[%c0_1, %c0_2], %0 {strides = array<i32>} : memref<8x128xf32, #tpu.memory_space<vmem>>, vector<8x128xf32>,
    return
  }
  func.func @transform_0(%arg0: i32) -> (i32, i32) {
    %c0_i32 = arith.constant 0 : i32
    %c0_i32_0 = arith.constant 0 : i32
    %c0_i32_1 = arith.constant 0 : i32
    return %c0_i32, %c0_i32_0 : i32, i32
  }
  func.func @transform_1(%arg0: i32) -> (i32, i32) {
    %c0_i32 = arith.constant 0 : i32
    %c0_i32_0 = arith.constant 0 : i32
    %c0_i32_1 = arith.constant 0 : i32
    return %c0_i32, %c0_i32_0 : i32, i32
  }
}

module attributes {stable_mosaic.version = 11 : i64} {
  func.func @_time_matmul_kernel(%arg0: i32, %arg1: memref<8x8x16xf32, #tpu.memory_space<vmem>>, %arg2: memref<16x512xbf16, #tpu.memory_space<vmem>>, %arg3: memref<1x512xf32, #tpu.memory_space<vmem>>, %arg4: memref<8x8x512xf32, #tpu.memory_space<vmem>>) attributes {dimension_semantics = [#tpu.dimension_semantics<parallel>], iteration_bounds = array<i64: 1>, scalar_prefetch = 0 : i64, scratch_operands = 0 : i64, tpu.core_type = #tpu.core_type<tc>, window_params = [{transform_indices = @transform_0, window_bounds = array<i64: 8, 8, 16>}, {pipeline_mode = #tpu.pipeline_mode<synchronous>, transform_indices = @transform_1, window_bounds = array<i64: 16, 512>}, {pipeline_mode = #tpu.pipeline_mode<synchronous>, transform_indices = @transform_2, window_bounds = array<i64: 1, 512>}, {transform_indices = @transform_3, window_bounds = array<i64: 8, 8, 512>}]} {
    %c0 = arith.constant 0 : index
    %c0_0 = arith.constant 0 : index
    %c0_1 = arith.constant 0 : index
    %0 = vector.load %arg1[%c0, %c0_0, %c0_1] : memref<8x8x16xf32, #tpu.memory_space<vmem>>, vector<8x8x16xf32>
    %1 = vector.shape_cast %0 : vector<8x8x16xf32> to vector<64x16xf32>
    %2 = arith.truncf %1 : vector<64x16xf32> to vector<64x16xbf16>
    %c0_2 = arith.constant 0 : index
    %c0_3 = arith.constant 0 : index
    %3 = vector.load %arg2[%c0_2, %c0_3] : memref<16x512xbf16, #tpu.memory_space<vmem>>, vector<16x512xbf16>
    %cst = arith.constant dense<0.000000e+00> : vector<64x512xf32>
    %4 = tpu.matmul %2, %3, %cst {dimension_numbers = #tpu.dot_dimension_numbers<[1], [0], [0], [1], [0, 0, 1, 1], [], []>} : vector<64x16xbf16>, vector<16x512xbf16>, vector<64x512xf32> -> vector<64x512xf32>
    %c0_4 = arith.constant 0 : index
    %c0_5 = arith.constant 0 : index
    %5 = vector.load %arg3[%c0_4, %c0_5] : memref<1x512xf32, #tpu.memory_space<vmem>>, vector<1x512xf32>
    %6 = vector.broadcast %5 : vector<1x512xf32> to vector<64x512xf32>
    %7 = arith.addf %4, %6 : vector<64x512xf32>
    %8 = vector.shape_cast %7 : vector<64x512xf32> to vector<8x8x512xf32>
    %c0_6 = arith.constant 0 : index
    %c0_7 = arith.constant 0 : index
    %c0_8 = arith.constant 0 : index
    %9 = vector.load %arg4[%c0_6, %c0_7, %c0_8] : memref<8x8x512xf32, #tpu.memory_space<vmem>>, vector<8x8x512xf32>
    tpu.vector_store %arg4[%c0_6, %c0_7, %c0_8], %8 {strides = array<i32>} : memref<8x8x512xf32, #tpu.memory_space<vmem>>, vector<8x8x512xf32>,
    return
  }
  func.func @transform_0(%arg0: i32) -> (i32, i32, i32) {
    %c0_i32 = arith.constant 0 : i32
    %c0_i32_0 = arith.constant 0 : i32
    %c0_i32_1 = arith.constant 0 : i32
    return %arg0, %c0_i32, %c0_i32_0 : i32, i32, i32
  }
  func.func @transform_1(%arg0: i32) -> (i32, i32) {
    %c0_i32 = arith.constant 0 : i32
    %c0_i32_0 = arith.constant 0 : i32
    %c0_i32_1 = arith.constant 0 : i32
    return %c0_i32, %c0_i32_0 : i32, i32
  }
  func.func @transform_2(%arg0: i32) -> (i32, i32) {
    %c0_i32 = arith.constant 0 : i32
    %c0_i32_0 = arith.constant 0 : i32
    %c0_i32_1 = arith.constant 0 : i32
    return %c0_i32, %c0_i32_0 : i32, i32
  }
  func.func @transform_3(%arg0: i32) -> (i32, i32, i32) {
    %c0_i32 = arith.constant 0 : i32
    %c0_i32_0 = arith.constant 0 : i32
    %c0_i32_1 = arith.constant 0 : i32
    return %arg0, %c0_i32, %c0_i32_0 : i32, i32, i32
  }
}

</mosaic_0001>

<llo_original>
// kernel: tpu_custom_call.1
$region0: #{tpu_custom_call.1}
  #allocation0 [shape = 'u32[]', space=smem, size = 0x4, offset = 0x4, fixed_abs, tag = 'smem constant byte address 0x4 - core index']
  #allocation1 [shape = 'u32[144,128]{1,0:T(1,128)}', space=vmem, size = 0x12000, scoped, tag = 'internal scratch']
  %s0 = inlined_call_operand.hbm [shape: f32[8,128], index: 0, kind: input, shape index: {}]
  %s1 = inlined_call_operand.hbm [shape: f32[8,128], index: 1, kind: output, shape index: {}]
  %s2 = sld [smem:[#allocation0]]
  $region18: #{tpu_custom_call.1} parent=0
    _
  %s4 = ssub.s32 1, %s2
  %s5 = scalar_select 0, %s4, %s2
  $region1: #{tpu_custom_call.1} parent=0
    #allocation2 [shape = 'u8[4096]{0}', space=vmem, size = 0x1000, scoped, tag = 'input window, operand 0, single buffered']
    #allocation3 [shape = 's32[1]{0}', space=sflag, size = 0x4, scoped, tag = 'scoped memory for tpu_custom_call.1']
    #allocation4 [shape = 's32[1]{0}', space=sflag, size = 0x4, scoped, tag = 'scoped memory for tpu_custom_call.1']
    #allocation5 [shape = 'u8[4096]{0}', space=vmem, size = 0x1000, scoped, tag = 'output window, operand 0, single buffered']
    %6 = vsyncpa [#allocation3], 0
    %7 = vsyncpa [#allocation4], 0
    // Predicated region
    $region2: #{tpu_custom_call.1} parent=1 // pred_check
      _
    $region3: #{tpu_custom_call.1} parent=1 // pred_check_branch
      %9 = sbr.rel (0) target = $region5
    $region4: #{tpu_custom_call.1} parent=1 // pred_region
      %s11 = ssub.s32 128, 128
      %12 = vsyncadd [#allocation3], %s11
      %s14 = sshll.u32 [#allocation2], 4
      %s15 = int_to_ptr.vmem [resolvable:$true] %s14
      %17 = dma.hbm_to_vmem [thread:$0]  %s0, 128, %s15, [#allocation3]
    $region5: #{tpu_custom_call.1} parent=1 // pred_fallthru
      _
    // Predicated region
    $region6: #{tpu_custom_call.1} parent=1 // pred_check
      _
    $region7: #{tpu_custom_call.1} parent=1 // pred_check_branch
      %19 = sbr.rel (0) target = $region9
    $region8: #{tpu_custom_call.1} parent=1 // pred_region
      %20 = dma.done [#allocation3], 128
    $region9: #{tpu_custom_call.1} parent=1 // pred_fallthru
      _
    %v21 = vld [vmem:[#allocation2] sm:$0xff]
    %22 = vst [vmem:[#allocation5] sm:$0xff] %v21
    // Predicated region
    $region10: #{tpu_custom_call.1} parent=1 // pred_check
      _
    $region11: #{tpu_custom_call.1} parent=1 // pred_check_branch
      %24 = sbr.rel (0) target = $region13
    $region12: #{tpu_custom_call.1} parent=1 // pred_region
      %s26 = ssub.s32 128, 128
      %27 = vsyncadd [#allocation4], %s26
      %s29 = sshll.u32 [#allocation5], 4
      %s30 = int_to_ptr.vmem [resolvable:$true] %s29
      %32 = dma.vmem_to_hbm [thread:$0]  %s30, 128, %s1, [#allocation4]
    $region13: #{tpu_custom_call.1} parent=1 // pred_fallthru
      _
    // Predicated region
    $region14: #{tpu_custom_call.1} parent=1 // pred_check
      _
    $region15: #{tpu_custom_call.1} parent=1 // pred_check_branch
      %34 = sbr.rel (0) target = $region17
    $region16: #{tpu_custom_call.1} parent=1 // pred_region
      %35 = dma.done [#allocation4], 128
    $region17: #{tpu_custom_call.1} parent=1 // pred_fallthru
      _
    %36 = vsyncpa [#allocation3], 1
    %37 = vsyncpa [#allocation4], 1

// kernel: tpu_custom_call.1
$region0: #{tpu_custom_call.1}
  #allocation0 [shape = 'u32[]', space=smem, size = 0x4, offset = 0x4, fixed_abs, tag = 'smem constant byte address 0x4 - core index']
  #allocation1 [shape = 'u32[144,128]{1,0:T(1,128)}', space=vmem, size = 0x12000, scoped, tag = 'internal scratch']
  %s0 = inlined_call_operand.hbm [shape: f32[8,8,16], index: 0, kind: input, shape index: {}]
  %s1 = inlined_call_operand.hbm [shape: bf16[16,512], index: 1, kind: input, shape index: {}]
  %s2 = inlined_call_operand.hbm [shape: f32[1,512], index: 2, kind: input, shape index: {}]
  %s3 = inlined_call_operand.hbm [shape: f32[8,8,512], index: 3, kind: output, shape index: {}]
  %s4 = sld [smem:[#allocation0]]
  $region34: #{tpu_custom_call.1} parent=0
    _
  %s6 = ssub.s32 1, %s4
  %s7 = scalar_select 0, %s6, %s4
  $region1: #{tpu_custom_call.1} parent=0
    #allocation2 [shape = 'u8[32768]{0}', space=vmem, size = 0x8000, scoped, tag = 'input window, operand 0, single buffered']
    #allocation3 [shape = 's32[1]{0}', space=sflag, size = 0x4, scoped, tag = 'scoped memory for tpu_custom_call.1']
    #allocation4 [shape = 's32[1]{0}', space=sflag, size = 0x4, scoped, tag = 'scoped memory for tpu_custom_call.1']
    #allocation5 [shape = 'u8[16384]{0}', space=vmem, size = 0x4000, scoped, tag = 'input window, operand 1, single buffered']
    #allocation6 [shape = 's32[1]{0}', space=sflag, size = 0x4, scoped, tag = 'scoped memory for tpu_custom_call.1']
    #allocation7 [shape = 'u8[2048]{0}', space=vmem, size = 0x800, scoped, tag = 'input window, operand 2, single buffered']
    #allocation8 [shape = 'u8[131072]{0}', space=vmem, size = 0x20000, scoped, tag = 'output window, operand 0, single buffered']
    %8 = vsyncpa [#allocation3], 0
    %9 = vsyncpa [#allocation6], 0
    %10 = vsyncpa [#allocation4], 0
    // Predicated region
    $region2: #{tpu_custom_call.1} parent=1 // pred_check
      _
    $region3: #{tpu_custom_call.1} parent=1 // pred_check_branch
      %12 = sbr.rel (0) target = $region5
    $region4: #{tpu_custom_call.1} parent=1 // pred_region
      %s14 = ssub.s32 1024, 1024
      %15 = vsyncadd [#allocation3], %s14
      %s16 = sshll.u32 [#allocation2], 4
      %s17 = int_to_ptr.vmem [resolvable:$true] %s16
      %22 = dma.hbm_to_vmem [thread:$0]  %s0, 1024, %s17, [#allocation3], 128, 128, 8
    $region5: #{tpu_custom_call.1} parent=1 // pred_fallthru
      _
    // Predicated region
    $region6: #{tpu_custom_call.1} parent=1 // pred_check
      _
    $region7: #{tpu_custom_call.1} parent=1 // pred_check_branch
      %24 = sbr.rel (0) target = $region9
    $region8: #{tpu_custom_call.1} parent=1 // pred_region
      %s26 = ssub.s32 512, 512
      %27 = vsyncadd [#allocation6], %s26
      %s28 = sshll.u32 [#allocation5], 4
      %s29 = int_to_ptr.vmem [resolvable:$true] %s28
      %34 = dma.hbm_to_vmem [thread:$0]  %s1, 512, %s29, [#allocation6], 256, 256, 16
    $region9: #{tpu_custom_call.1} parent=1 // pred_fallthru
      _
    // Predicated region
    $region10: #{tpu_custom_call.1} parent=1 // pred_check
      _
    $region11: #{tpu_custom_call.1} parent=1 // pred_check_branch
      %36 = sbr.rel (0) target = $region13
    $region12: #{tpu_custom_call.1} parent=1 // pred_region
      %s38 = ssub.s32 64, 64
      %39 = vsyncadd [#allocation6], %s38
      %s41 = sshll.u32 [#allocation7], 4
      %s42 = int_to_ptr.vmem [resolvable:$true] %s41
      %44 = dma.hbm_to_vmem [thread:$0]  %s2, 64, %s42, [#allocation6]
    $region13: #{tpu_custom_call.1} parent=1 // pred_fallthru
      _
    // Predicated region
    $region14: #{tpu_custom_call.1} parent=1 // pred_check
      _
    $region15: #{tpu_custom_call.1} parent=1 // pred_check_branch
      %46 = sbr.rel (0) target = $region17
    $region16: #{tpu_custom_call.1} parent=1 // pred_region
      %47 = dma.done [#allocation3], 1024
    $region17: #{tpu_custom_call.1} parent=1 // pred_fallthru
      _
    // Predicated region
    $region18: #{tpu_custom_call.1} parent=1 // pred_check
      _
    $region19: #{tpu_custom_call.1} parent=1 // pred_check_branch
      %49 = sbr.rel (0) target = $region21
    $region20: #{tpu_custom_call.1} parent=1 // pred_region
      %50 = dma.done [#allocation6], 512
    $region21: #{tpu_custom_call.1} parent=1 // pred_fallthru
      _
    // Predicated region
    $region22: #{tpu_custom_call.1} parent=1 // pred_check
      _
    $region23: #{tpu_custom_call.1} parent=1 // pred_check_branch
      %52 = sbr.rel (0) target = $region25
    $region24: #{tpu_custom_call.1} parent=1 // pred_region
      %53 = dma.done [#allocation6], 64
    $region25: #{tpu_custom_call.1} parent=1 // pred_fallthru
      _
    %v55 = vld [vmem:[#allocation2] sm:$0xff]
    %v56 = vld [vmem:[#allocation2 + $0x8] sm:$0xff]
    %v57 = vld [vmem:[#allocation2 + $0x10] sm:$0xff]
    %v58 = vld [vmem:[#allocation2 + $0x18] sm:$0xff]
    %v59 = vld [vmem:[#allocation2 + $0x20] sm:$0xff]
    %v60 = vld [vmem:[#allocation2 + $0x28] sm:$0xff]
    %v61 = vld [vmem:[#allocation2 + $0x30] sm:$0xff]
    %v62 = vld [vmem:[#allocation2 + $0x38] sm:$0xff]
    %v63 = vpack.c.bf16 %v56, %v55
    %v64 = vpack.c.bf16 %v58, %v57
    %v65 = vpack.c.bf16 %v60, %v59
    %v66 = vpack.c.bf16 %v62, %v61
    %v67 = vld [vmem:[#allocation5] sm:$0xff]
    %v68 = vld [vmem:[#allocation5 + $0x8] sm:$0xff]
    %v69 = vld [vmem:[#allocation5 + $0x10] sm:$0xff]
    %v70 = vld [vmem:[#allocation5 + $0x18] sm:$0xff]
    %v71 = vld [vmem:[#allocation7] sm:$0xf]
    %v73 = vlaneseq
    %v74 = vshrl.u32 %v73, 7
    %v75 = vsub.s32 0, %v74
    %v76 = vrot.slane %v71, %v75
    %v77 = vlaneseq
    %v78 = vshrl.u32 %v77, 7
    %v79 = vsub.s32 1, %v78
    %v80 = vrot.slane %v71, %v79
    %v81 = vlaneseq
    %v82 = vshrl.u32 %v81, 7
    %v83 = vsub.s32 2, %v82
    %v84 = vrot.slane %v71, %v83
    %v85 = vlaneseq
    %v86 = vshrl.u32 %v85, 7
    %v87 = vsub.s32 3, %v86
    %v88 = vrot.slane %v71, %v87
    %v97 = vunpack.c.l.b16 %v67
    %v98 = vunpack.c.h.b16 %v67
    %v99 = vunpack.c.l.b16 %v68
    %v100 = vunpack.c.h.b16 %v68
    %v101 = vunpack.c.l.b16 %v69
    %v102 = vunpack.c.h.b16 %v69
    %v103 = vunpack.c.l.b16 %v70
    %v104 = vunpack.c.h.b16 %v70
    %v105 = vpack.c.b16 %v101, %v97
    %v106 = vpack.c.b16 %v102, %v98
    %v107 = vpack.c.b16 %v103, %v99
    %v108 = vpack.c.b16 %v104, %v100
    %vm113 = vcmask 130048
    %v115 = vsel %vm113, %v63, 0
    %v118 = vsel %vm113, %v64, 0
    %v121 = vsel %vm113, %v65, 0
    %v124 = vsel %vm113, %v66, 0
    %126 = vmatprep.subr.bf16.mxu0 0
    %127 = vmatpush1.bf16.msra.mxu0 0
    %128 = vmatprep.subr.bf16.mxu0 0
    %129 = vmatpush1.bf16.msra.mxu0 0
    %130 = vmatprep.subr.bf16.mxu0 0
    %131 = vmatpush1.bf16.msra.mxu0 0
    %132 = vmatprep.subr.bf16.mxu0 0
    %133 = vmatpush1.bf16.msra.mxu0 0
    %134 = vmatprep.subr.bf16.mxu0 0
    %135 = vmatpush1.bf16.msra.mxu0 0
    %136 = vmatprep.subr.bf16.mxu0 0
    %137 = vmatpush1.bf16.msra.mxu0 0
    %138 = vmatprep.subr.bf16.mxu0 0
    %139 = vmatpush1.bf16.msra.mxu0 0
    %140 = vmatprep.subr.bf16.mxu0 %v106
    %141 = vmatpush1.bf16.msra.mxu0 %v105
    %142 = vmatprep.subr.bf16.mxu0 0
    %143 = vmatpush2.bf16.msra.mxu0 0
    %144 = vmatprep.subr.bf16.mxu0 0
    %145 = vmatpush2.bf16.msra.mxu0 0
    %146 = vmatprep.subr.bf16.mxu0 0
    %147 = vmatpush2.bf16.msra.mxu0 0
    %148 = vmatprep.subr.bf16.mxu0 0
    %149 = vmatpush2.bf16.msra.mxu0 0
    %150 = vmatprep.subr.bf16.mxu0 0
    %151 = vmatpush2.bf16.msra.mxu0 0
    %152 = vmatprep.subr.bf16.mxu0 0
    %153 = vmatpush2.bf16.msra.mxu0 0
    %154 = vmatprep.subr.bf16.mxu0 0
    %155 = vmatpush2.bf16.msra.mxu0 0
    %156 = vmatprep.subr.bf16.mxu0 0
    %157 = vmatpush2.bf16.msra.mxu0 0
    %158 = vmatprep.mubr.bf16.mxu0 0
    %159 = vmatmul.mubr.bf16.gmra.mxu0 %v115
    %v160 = vpop.f32.mrf.mxu0
    %v161 = vadd.f32 %v76, %v160
    %v162 = vpop.f32.mrf.mxu0
    %v163 = vadd.f32 %v80, %v162
    %v164 = vpop.f32.mrf.mxu0
    %v165 = vadd.f32 %v76, %v164
    %v166 = vpop.f32.mrf.mxu0
    %v167 = vadd.f32 %v80, %v166
    %168 = vmatprep.mubr.bf16.mxu0 0
    %169 = vmatmul.mubr.bf16.gmra.mxu0 %v118
    %v170 = vpop.f32.mrf.mxu0
    %v171 = vadd.f32 %v76, %v170
    %v172 = vpop.f32.mrf.mxu0
    %v173 = vadd.f32 %v80, %v172
    %v174 = vpop.f32.mrf.mxu0
    %v175 = vadd.f32 %v76, %v174
    %v176 = vpop.f32.mrf.mxu0
    %v177 = vadd.f32 %v80, %v176
    %178 = vmatprep.mubr.bf16.mxu0 0
    %179 = vmatmul.mubr.bf16.gmra.mxu0 %v121
    %v180 = vpop.f32.mrf.mxu0
    %v181 = vadd.f32 %v76, %v180
    %v182 = vpop.f32.mrf.mxu0
    %v183 = vadd.f32 %v80, %v182
    %v184 = vpop.f32.mrf.mxu0
    %v185 = vadd.f32 %v76, %v184
    %v186 = vpop.f32.mrf.mxu0
    %v187 = vadd.f32 %v80, %v186
    %188 = vmatprep.mubr.bf16.mxu0 0
    %189 = vmatmul.mubr.bf16.gmra.mxu0 %v124
    %v190 = vpop.f32.mrf.mxu0
    %v191 = vadd.f32 %v76, %v190
    %v192 = vpop.f32.mrf.mxu0
    %v193 = vadd.f32 %v80, %v192
    %v194 = vpop.f32.mrf.mxu0
    %v195 = vadd.f32 %v76, %v194
    %v196 = vpop.f32.mrf.mxu0
    %v197 = vadd.f32 %v80, %v196
    %198 = vdwg.mxu0
    %199 = vmatprep.subr.bf16.mxu0 0
    %200 = vmatpush1.bf16.msra.mxu0 0
    %201 = vmatprep.subr.bf16.mxu0 0
    %202 = vmatpush1.bf16.msra.mxu0 0
    %203 = vmatprep.subr.bf16.mxu0 0
    %204 = vmatpush1.bf16.msra.mxu0 0
    %205 = vmatprep.subr.bf16.mxu0 0
    %206 = vmatpush1.bf16.msra.mxu0 0
    %207 = vmatprep.subr.bf16.mxu0 0
    %208 = vmatpush1.bf16.msra.mxu0 0
    %209 = vmatprep.subr.bf16.mxu0 0
    %210 = vmatpush1.bf16.msra.mxu0 0
    %211 = vmatprep.subr.bf16.mxu0 0
    %212 = vmatpush1.bf16.msra.mxu0 0
    %213 = vmatprep.subr.bf16.mxu0 %v108
    %214 = vmatpush1.bf16.msra.mxu0 %v107
    %215 = vmatprep.subr.bf16.mxu0 0
    %216 = vmatpush2.bf16.msra.mxu0 0
    %217 = vmatprep.subr.bf16.mxu0 0
    %218 = vmatpush2.bf16.msra.mxu0 0
    %219 = vmatprep.subr.bf16.mxu0 0
    %220 = vmatpush2.bf16.msra.mxu0 0
    %221 = vmatprep.subr.bf16.mxu0 0
    %222 = vmatpush2.bf16.msra.mxu0 0
    %223 = vmatprep.subr.bf16.mxu0 0
    %224 = vmatpush2.bf16.msra.mxu0 0
    %225 = vmatprep.subr.bf16.mxu0 0
    %226 = vmatpush2.bf16.msra.mxu0 0
    %227 = vmatprep.subr.bf16.mxu0 0
    %228 = vmatpush2.bf16.msra.mxu0 0
    %229 = vmatprep.subr.bf16.mxu0 0
    %230 = vmatpush2.bf16.msra.mxu0 0
    %231 = vmatprep.mubr.bf16.mxu0 0
    %232 = vmatmul.mubr.bf16.gmra.mxu0 %v115
    %v233 = vpop.f32.mrf.mxu0
    %v234 = vadd.f32 %v84, %v233
    %v235 = vpop.f32.mrf.mxu0
    %v236 = vadd.f32 %v88, %v235
    %v237 = vpop.f32.mrf.mxu0
    %v238 = vadd.f32 %v84, %v237
    %v239 = vpop.f32.mrf.mxu0
    %v240 = vadd.f32 %v88, %v239
    %241 = vmatprep.mubr.bf16.mxu0 0
    %242 = vmatmul.mubr.bf16.gmra.mxu0 %v118
    %v243 = vpop.f32.mrf.mxu0
    %v244 = vadd.f32 %v84, %v243
    %v245 = vpop.f32.mrf.mxu0
    %v246 = vadd.f32 %v88, %v245
    %v247 = vpop.f32.mrf.mxu0
    %v248 = vadd.f32 %v84, %v247
    %v249 = vpop.f32.mrf.mxu0
    %v250 = vadd.f32 %v88, %v249
    %251 = vmatprep.mubr.bf16.mxu0 0
    %252 = vmatmul.mubr.bf16.gmra.mxu0 %v121
    %v253 = vpop.f32.mrf.mxu0
    %v254 = vadd.f32 %v84, %v253
    %v255 = vpop.f32.mrf.mxu0
    %v256 = vadd.f32 %v88, %v255
    %v257 = vpop.f32.mrf.mxu0
    %v258 = vadd.f32 %v84, %v257
    %v259 = vpop.f32.mrf.mxu0
    %v260 = vadd.f32 %v88, %v259
    %261 = vmatprep.mubr.bf16.mxu0 0
    %262 = vmatmul.mubr.bf16.gmra.mxu0 %v124
    %v263 = vpop.f32.mrf.mxu0
    %v264 = vadd.f32 %v84, %v263
    %v265 = vpop.f32.mrf.mxu0
    %v266 = vadd.f32 %v88, %v265
    %v267 = vpop.f32.mrf.mxu0
    %v268 = vadd.f32 %v84, %v267
    %v269 = vpop.f32.mrf.mxu0
    %v270 = vadd.f32 %v88, %v269
    %271 = vdwg.mxu0
    %272 = vst [vmem:[#allocation8] sm:$0xff] %v161
    %273 = vst [vmem:[#allocation8 + $0x8] sm:$0xff] %v163
    %274 = vst [vmem:[#allocation8 + $0x10] sm:$0xff] %v234
    %275 = vst [vmem:[#allocation8 + $0x18] sm:$0xff] %v236
    %276 = vst [vmem:[#allocation8 + $0x20] sm:$0xff] %v165
    %277 = vst [vmem:[#allocation8 + $0x28] sm:$0xff] %v167
    %278 = vst [vmem:[#allocation8 + $0x30] sm:$0xff] %v238
    %279 = vst [vmem:[#allocation8 + $0x38] sm:$0xff] %v240
    %280 = vst [vmem:[#allocation8 + $0x40] sm:$0xff] %v171
    %281 = vst [vmem:[#allocation8 + $0x48] sm:$0xff] %v173
    %282 = vst [vmem:[#allocation8 + $0x50] sm:$0xff] %v244
    %283 = vst [vmem:[#allocation8 + $0x58] sm:$0xff] %v246
    %284 = vst [vmem:[#allocation8 + $0x60] sm:$0xff] %v175
    %285 = vst [vmem:[#allocation8 + $0x68] sm:$0xff] %v177
    %286 = vst [vmem:[#allocation8 + $0x70] sm:$0xff] %v248
    %287 = vst [vmem:[#allocation8 + $0x78] sm:$0xff] %v250
    %288 = vst [vmem:[#allocation8 + $0x80] sm:$0xff] %v181
    %289 = vst [vmem:[#allocation8 + $0x88] sm:$0xff] %v183
    %290 = vst [vmem:[#allocation8 + $0x90] sm:$0xff] %v254
    %291 = vst [vmem:[#allocation8 + $0x98] sm:$0xff] %v256
    %292 = vst [vmem:[#allocation8 + $0xa0] sm:$0xff] %v185
    %293 = vst [vmem:[#allocation8 + $0xa8] sm:$0xff] %v187
    %294 = vst [vmem:[#allocation8 + $0xb0] sm:$0xff] %v258
    %295 = vst [vmem:[#allocation8 + $0xb8] sm:$0xff] %v260
    %296 = vst [vmem:[#allocation8 + $0xc0] sm:$0xff] %v191
    %297 = vst [vmem:[#allocation8 + $0xc8] sm:$0xff] %v193
    %298 = vst [vmem:[#allocation8 + $0xd0] sm:$0xff] %v264
    %299 = vst [vmem:[#allocation8 + $0xd8] sm:$0xff] %v266
    %300 = vst [vmem:[#allocation8 + $0xe0] sm:$0xff] %v195
    %301 = vst [vmem:[#allocation8 + $0xe8] sm:$0xff] %v197
    %302 = vst [vmem:[#allocation8 + $0xf0] sm:$0xff] %v268
    %303 = vst [vmem:[#allocation8 + $0xf8] sm:$0xff] %v270
    // Predicated region
    $region26: #{tpu_custom_call.1} parent=1 // pred_check
      _
    $region27: #{tpu_custom_call.1} parent=1 // pred_check_branch
      %305 = sbr.rel (0) target = $region29
    $region28: #{tpu_custom_call.1} parent=1 // pred_region
      %s307 = ssub.s32 4096, 4096
      %308 = vsyncadd [#allocation4], %s307
      %s309 = sshll.u32 [#allocation8], 4
      %s310 = int_to_ptr.vmem [resolvable:$true] %s309
      %315 = dma.vmem_to_hbm [thread:$0]  %s310, 4096, %s3, [#allocation4], 512, 512, 32
    $region29: #{tpu_custom_call.1} parent=1 // pred_fallthru
      _
    // Predicated region
    $region30: #{tpu_custom_call.1} parent=1 // pred_check
      _
    $region31: #{tpu_custom_call.1} parent=1 // pred_check_branch
      %317 = sbr.rel (0) target = $region33
    $region32: #{tpu_custom_call.1} parent=1 // pred_region
      %318 = dma.done [#allocation4], 4096
    $region33: #{tpu_custom_call.1} parent=1 // pred_fallthru
      _
    %319 = vsyncpa [#allocation3], 1
    %320 = vsyncpa [#allocation6], 1
    %321 = vsyncpa [#allocation4], 1

</llo_original>
